<compile_context>
chip_gen: v5e
topology: v5e:2x2
jax: 0.10.0
libtpu: 0.0.40
codegen_flags: <defaults>
</compile_context>

<pallas_src>
import functools

import jax
import jax.numpy as jnp
from jax import lax
from jax.experimental import pallas as pl
from jax.experimental.pallas import tpu as pltpu


def _self_attention_kernel(x_ref, wqkv_ref, bqkv_ref, wo_ref, bo_ref, out_ref,
                           q_scr, k_scr, v_scr,
                           *, n_heads, d_head, scale, q_block, mxu_dtype):
    qi = pl.program_id(1)
    S = x_ref.shape[1]
    D = n_heads * d_head

    # ---- Q/K/V projection: once per batch element, resident across q-tiles ----
    @pl.when(qi == 0)
    def _project_qkv():
        x = x_ref[0]                                                  # (S, D)
        qkv = jnp.dot(x, wqkv_ref[...],
                      preferred_element_type=jnp.float32)
        qkv = qkv + bqkv_ref[0]                                       # (S, 3D) f32
        # Split heads into head-major scratch (one-off relayout, amortized over
        # all q-tiles of this batch element); fold softmax scale into Q.
        for h in range(n_heads):
            lo = h * d_head
            hi = lo + d_head
            q_scr[h] = (qkv[:, lo:hi] * scale).astype(mxu_dtype)
            k_scr[h] = qkv[:, D + lo:D + hi].astype(mxu_dtype)
            v_scr[h] = qkv[:, 2 * D + lo:2 * D + hi].astype(mxu_dtype)

    # ---- attention for this q-tile, all heads batched ----
    start = qi * q_block
    if q_block == S:                     # static: single q-tile per batch elem
        q_t = q_scr[...]                                              # (H, S, dh)
    else:
        q_t = q_scr[:, pl.ds(pl.multiple_of(start, q_block), q_block), :]

    k_all = k_scr[...]                                                # (H, S, dh)
    v_all = v_scr[...]                                                # (H, S, dh)

    # scores[h, q, s] = sum_d q_t[h, q, d] * k_all[h, s, d]   (scale pre-folded)
    scores = lax.dot_general(
        q_t, k_all,
        dimension_numbers=(((2,), (2,)), ((0,), (0,))),
        preferred_element_type=jnp.float32)                           # (H, qb, S)

    # causal additive bias, shared across heads
    row = lax.broadcasted_iota(jnp.int32, (q_block, S), 0) + start
    col = lax.broadcasted_iota(jnp.int32, (q_block, S), 1)
    bias = jnp.where(col > row, jnp.float32(-1e9), jnp.float32(0.0))  # (qb, S)
    scores = scores + bias[None, :, :]

    # numerically stable softmax in f32
    m = jnp.max(scores, axis=-1, keepdims=True)
    e = jnp.exp(scores - m)
    p = e * pl.reciprocal(jnp.sum(e, axis=-1, keepdims=True), approx=True)

    # o[h, q, d] = sum_s p[h, q, s] * v_all[h, s, d]
    o = lax.dot_general(
        p.astype(mxu_dtype), v_all,
        dimension_numbers=(((2,), (1,)), ((0,), (0,))),
        preferred_element_type=jnp.float32)                           # (H, qb, dh)

    # Output projection without concat/transpose:
    #   out = concat_h(o_h) @ Wo = sum_h  o_h @ Wo[h*dh:(h+1)*dh, :]
    out_h = lax.dot_general(
        o.astype(mxu_dtype), wo_ref[...],
        dimension_numbers=(((2,), (1,)), ((0,), (0,))),
        preferred_element_type=jnp.float32)                           # (H, qb, D)
    out = jnp.sum(out_h, axis=0) + bo_ref[0]                          # (qb, D)
    out_ref[0] = out.astype(out_ref.dtype)


def _pick_q_block(S):
    if S <= 512:
        return S
    for cand in (512, 256, 128):
        if S % cand == 0:
            return cand
    return S


def self_attention_pallas(x, wqkv, bqkv, wo, bo, *, n_heads,
                          q_block=None, mxu_dtype=jnp.bfloat16):
    """x: (bs, S, D).  wqkv: (D, 3D), bqkv: (3D,), wo: (D, D), bo: (D,)."""
    bs, S, D = x.shape
    assert D % n_heads == 0
    d_head = D // n_heads
    scale = float(d_head) ** (-0.5)

    if q_block is None:
        q_block = _pick_q_block(S)
    assert S % q_block == 0, "S must be divisible by the q-tile size"
    n_q = S // q_block

    out_dtype = x.dtype

    # MXU operands in mxu_dtype (bf16 by default); biases stay f32.
    x_m = x.astype(mxu_dtype)
    wqkv_m = wqkv.astype(mxu_dtype)
    # Wo reshaped head-major so the output projection is a head-batched dot.
    wo_m = wo.reshape(n_heads, d_head, D).astype(mxu_dtype)
    bqkv_2d = bqkv.reshape(1, 3 * D).astype(jnp.float32)
    bo_2d = bo.reshape(1, D).astype(jnp.float32)

    kernel = functools.partial(
        _self_attention_kernel,
        n_heads=n_heads, d_head=d_head, scale=scale,
        q_block=q_block, mxu_dtype=mxu_dtype)

    # advisory cost estimate for XLA's scheduler
    flops = bs * (2 * S * D * 3 * D       # QKV projection
                  + 4 * S * S * D         # QK^T and PV
                  + 2 * S * D * D)        # output projection
    transcendentals = bs * n_heads * S * S
    itemsize = jnp.dtype(mxu_dtype).itemsize
    bytes_accessed = (bs * S * D * (itemsize + jnp.dtype(out_dtype).itemsize)
                      + (3 * D * D + D * D) * itemsize + 4 * D * 4)

    return pl.pallas_call(
        kernel,
        out_shape=jax.ShapeDtypeStruct((bs, S, D), out_dtype),
        grid=(bs, n_q),
        in_specs=[
            pl.BlockSpec((1, S, D), lambda b, qi: (b, 0, 0)),             # x (resident per b)
            pl.BlockSpec((D, 3 * D), lambda b, qi: (0, 0)),               # Wqkv (resident)
            pl.BlockSpec((1, 3 * D), lambda b, qi: (0, 0)),               # bqkv
            pl.BlockSpec((n_heads, d_head, D), lambda b, qi: (0, 0, 0)),  # Wo head-major
            pl.BlockSpec((1, D), lambda b, qi: (0, 0)),                   # bo
        ],
        out_specs=pl.BlockSpec((1, q_block, D), lambda b, qi: (b, qi, 0)),
        scratch_shapes=[
            pltpu.VMEM((n_heads, S, d_head), mxu_dtype),   # Q (pre-scaled)
            pltpu.VMEM((n_heads, S, d_head), mxu_dtype),   # K
            pltpu.VMEM((n_heads, S, d_head), mxu_dtype),   # V
        ],
        compiler_params=pltpu.CompilerParams(
            dimension_semantics=("parallel", "arbitrary"),
            vmem_limit_bytes=32 * 1024 * 1024),
        cost_estimate=pl.CostEstimate(
            flops=int(flops), transcendentals=int(transcendentals),
            bytes_accessed=int(bytes_accessed)),
    )(x_m, wqkv_m, bqkv_2d, wo_m, bo_2d)


def self_attention_ref(x, wqkv, bqkv, wo, bo, *, n_heads):
    """Pure-JAX f32 reference matching the PyTorch forward (mask=False default)."""
    bs, S, D = x.shape
    d_head = D // n_heads
    scale = d_head ** (-0.5)
    qkv = x @ wqkv + bqkv                                   # (bs, S, 3D)
    q, k, v = jnp.split(qkv, 3, axis=-1)

    def split_heads(t):
        return t.reshape(bs, S, n_heads, d_head).transpose(0, 2, 1, 3)

    q, k, v = split_heads(q), split_heads(k), split_heads(v)
    scores = jnp.einsum("bhqd,bhkd->bhqk", q, k) * scale
    causal = jnp.triu(jnp.ones((S, S), dtype=bool), k=1)
    scores = jnp.where(causal[None, None], -1e9, scores)
    w = jax.nn.softmax(scores, axis=-1)
    out = jnp.einsum("bhqk,bhkd->bhqd", w, v)
    out = out.transpose(0, 2, 1, 3).reshape(bs, S, D)
    return out @ wo + bo


if __name__ == "__main__":
    # Small shapes consistent with the module: batch=2, seq=8, d_embed=32, n_heads=4.
    bs, S, D, H = 2, 8, 32, 4

    key = jax.random.PRNGKey(0)
    kx, kw1, kb1, kw2, kb2 = jax.random.split(key, 5)

    x = jax.random.normal(kx, (bs, S, D), dtype=jnp.float32)
    wqkv = jax.random.normal(kw1, (D, 3 * D), dtype=jnp.float32) * (1.0 / D ** 0.5)
    bqkv = jax.random.normal(kb1, (3 * D,), dtype=jnp.float32) * 0.02
    wo = jax.random.normal(kw2, (D, D), dtype=jnp.float32) * (1.0 / D ** 0.5)
    bo = jax.random.normal(kb2, (D,), dtype=jnp.float32) * 0.02

    ref = self_attention_ref(x, wqkv, bqkv, wo, bo, n_heads=H)

    # Structural check: f32 MXU operands, tight tolerance.
    out_f32 = jax.block_until_ready(
        self_attention_pallas(x, wqkv, bqkv, wo, bo, n_heads=H,
                              mxu_dtype=jnp.float32))
    assert out_f32.shape == (bs, S, D)
    assert jnp.allclose(out_f32, ref, atol=5e-3, rtol=5e-3), "f32 path mismatch"

    # Fast path: bf16 MXU operands with f32 accumulation; looser tolerance for
    # bf16 operand rounding.
    out_bf16 = jax.block_until_ready(
        self_attention_pallas(x, wqkv, bqkv, wo, bo, n_heads=H))
    assert out_bf16.shape == (bs, S, D)
    assert jnp.allclose(out_bf16, ref, atol=1e-1, rtol=1e-1), "bf16 path mismatch"

    print("KERNEL_OK")
</pallas_src>

<mosaic_0001>
module attributes {stable_mosaic.version = 11 : i64} {
  func.func @_self_attention_kernel(%arg0: i32, %arg1: i32, %arg2: memref<1x8x32xf32, #tpu.memory_space<vmem>>, %arg3: memref<32x96xf32, #tpu.memory_space<vmem>>, %arg4: memref<1x96xf32, #tpu.memory_space<vmem>>, %arg5: memref<4x8x32xf32, #tpu.memory_space<vmem>>, %arg6: memref<1x32xf32, #tpu.memory_space<vmem>>, %arg7: memref<1x8x32xf32, #tpu.memory_space<vmem>>, %arg8: memref<4x8x8xf32, #tpu.memory_space<vmem>>, %arg9: memref<4x8x8xf32, #tpu.memory_space<vmem>>, %arg10: memref<4x8x8xf32, #tpu.memory_space<vmem>>) attributes {dimension_semantics = [#tpu.dimension_semantics<parallel>, #tpu.dimension_semantics<arbitrary>], iteration_bounds = array<i64: 2, 1>, scalar_prefetch = 0 : i64, scratch_operands = 3 : i64, tpu.core_type = #tpu.core_type<tc>, window_params = [{transform_indices = @transform_0, window_bounds = array<i64: 1, 8, 32>}, {pipeline_mode = #tpu.pipeline_mode<synchronous>, transform_indices = @transform_1, window_bounds = array<i64: 32, 96>}, {pipeline_mode = #tpu.pipeline_mode<synchronous>, transform_indices = @transform_2, window_bounds = array<i64: 1, 96>}, {pipeline_mode = #tpu.pipeline_mode<synchronous>, transform_indices = @transform_3, window_bounds = array<i64: 4, 8, 32>}, {pipeline_mode = #tpu.pipeline_mode<synchronous>, transform_indices = @transform_4, window_bounds = array<i64: 1, 32>}, {transform_indices = @transform_5, window_bounds = array<i64: 1, 8, 32>}]} {
    %c0_i32 = arith.constant 0 : i32
    %0 = arith.cmpi eq, %arg1, %c0_i32 : i32
    %1 = arith.extui %0 : i1 to i32
    %c0_i32_0 = arith.constant 0 : i32
    %2 = arith.cmpi ne, %1, %c0_i32_0 : i32
    scf.if %2 {
      %c0_24 = arith.constant 0 : index
      %c0_25 = arith.constant 0 : index
      %c0_26 = arith.constant 0 : index
      %41 = vector.load %arg2[%c0_24, %c0_25, %c0_26] : memref<1x8x32xf32, #tpu.memory_space<vmem>>, vector<1x8x32xf32>
      %42 = vector.shape_cast %41 : vector<1x8x32xf32> to vector<8x32xf32>
      %c0_27 = arith.constant 0 : index
      %c0_28 = arith.constant 0 : index
      %43 = vector.load %arg3[%c0_27, %c0_28] : memref<32x96xf32, #tpu.memory_space<vmem>>, vector<32x96xf32>
      %cst_29 = arith.constant dense<0.000000e+00> : vector<8x96xf32>
      %44 = tpu.matmul %42, %43, %cst_29 {dimension_numbers = #tpu.dot_dimension_numbers<[1], [0], [0], [1], [0, 0, 1, 1], [], []>} : vector<8x32xf32>, vector<32x96xf32>, vector<8x96xf32> -> vector<8x96xf32>
      %c0_30 = arith.constant 0 : index
      %c0_31 = arith.constant 0 : index
      %45 = vector.load %arg4[%c0_30, %c0_31] : memref<1x96xf32, #tpu.memory_space<vmem>>, vector<1x96xf32>
      %46 = vector.shape_cast %45 : vector<1x96xf32> to vector<96xf32>
      %47 = vector.shape_cast %46 : vector<96xf32> to vector<1x96xf32>
      %48 = vector.broadcast %47 : vector<1x96xf32> to vector<8x96xf32>
      %49 = arith.addf %44, %48 : vector<8x96xf32>
      %50 = vector.extract_strided_slice %49 {offsets = [0, 0], sizes = [8, 8], strides = [1, 1]} : vector<8x96xf32> to vector<8x8xf32>
      %cst_32 = arith.constant 0.353553385 : f32
      %51 = vector.broadcast %cst_32 : f32 to vector<8x8xf32>
      %52 = arith.mulf %50, %51 : vector<8x8xf32>
      %c0_33 = arith.constant 0 : index
      %c0_34 = arith.constant 0 : index
      %c0_35 = arith.constant 0 : index
      %53 = vector.load %arg8[%c0_33, %c0_34, %c0_35] : memref<4x8x8xf32, #tpu.memory_space<vmem>>, vector<1x8x8xf32>
      %54 = vector.shape_cast %53 : vector<1x8x8xf32> to vector<8x8xf32>
      %55 = vector.shape_cast %52 : vector<8x8xf32> to vector<1x8x8xf32>
      tpu.vector_store %arg8[%c0_33, %c0_34, %c0_35], %55 {strides = array<i32>} : memref<4x8x8xf32, #tpu.memory_space<vmem>>, vector<1x8x8xf32>,
      %56 = vector.extract_strided_slice %49 {offsets = [0, 32], sizes = [8, 8], strides = [1, 1]} : vector<8x96xf32> to vector<8x8xf32>
      %c0_36 = arith.constant 0 : index
      %c0_37 = arith.constant 0 : index
      %c0_38 = arith.constant 0 : index
      %57 = vector.load %arg9[%c0_36, %c0_37, %c0_38] : memref<4x8x8xf32, #tpu.memory_space<vmem>>, vector<1x8x8xf32>
      %58 = vector.shape_cast %57 : vector<1x8x8xf32> to vector<8x8xf32>
      %59 = vector.shape_cast %56 : vector<8x8xf32> to vector<1x8x8xf32>
      tpu.vector_store %arg9[%c0_36, %c0_37, %c0_38], %59 {strides = array<i32>} : memref<4x8x8xf32, #tpu.memory_space<vmem>>, vector<1x8x8xf32>,
      %60 = vector.extract_strided_slice %49 {offsets = [0, 64], sizes = [8, 8], strides = [1, 1]} : vector<8x96xf32> to vector<8x8xf32>
      %c0_39 = arith.constant 0 : index
      %c0_40 = arith.constant 0 : index
      %c0_41 = arith.constant 0 : index
      %61 = vector.load %arg10[%c0_39, %c0_40, %c0_41] : memref<4x8x8xf32, #tpu.memory_space<vmem>>, vector<1x8x8xf32>
      %62 = vector.shape_cast %61 : vector<1x8x8xf32> to vector<8x8xf32>
      %63 = vector.shape_cast %60 : vector<8x8xf32> to vector<1x8x8xf32>
      tpu.vector_store %arg10[%c0_39, %c0_40, %c0_41], %63 {strides = array<i32>} : memref<4x8x8xf32, #tpu.memory_space<vmem>>, vector<1x8x8xf32>,
      %64 = vector.extract_strided_slice %49 {offsets = [0, 8], sizes = [8, 8], strides = [1, 1]} : vector<8x96xf32> to vector<8x8xf32>
      %cst_42 = arith.constant 0.353553385 : f32
      %65 = vector.broadcast %cst_42 : f32 to vector<8x8xf32>
      %66 = arith.mulf %64, %65 : vector<8x8xf32>
      %c1 = arith.constant 1 : index
      %c0_43 = arith.constant 0 : index
      %c0_44 = arith.constant 0 : index
      %67 = vector.load %arg8[%c1, %c0_43, %c0_44] : memref<4x8x8xf32, #tpu.memory_space<vmem>>, vector<1x8x8xf32>
      %68 = vector.shape_cast %67 : vector<1x8x8xf32> to vector<8x8xf32>
      %69 = vector.shape_cast %66 : vector<8x8xf32> to vector<1x8x8xf32>
      tpu.vector_store %arg8[%c1, %c0_43, %c0_44], %69 {strides = array<i32>} : memref<4x8x8xf32, #tpu.memory_space<vmem>>, vector<1x8x8xf32>,
      %70 = vector.extract_strided_slice %49 {offsets = [0, 40], sizes = [8, 8], strides = [1, 1]} : vector<8x96xf32> to vector<8x8xf32>
      %c1_45 = arith.constant 1 : index
      %c0_46 = arith.constant 0 : index
      %c0_47 = arith.constant 0 : index
      %71 = vector.load %arg9[%c1_45, %c0_46, %c0_47] : memref<4x8x8xf32, #tpu.memory_space<vmem>>, vector<1x8x8xf32>
      %72 = vector.shape_cast %71 : vector<1x8x8xf32> to vector<8x8xf32>
      %73 = vector.shape_cast %70 : vector<8x8xf32> to vector<1x8x8xf32>
      tpu.vector_store %arg9[%c1_45, %c0_46, %c0_47], %73 {strides = array<i32>} : memref<4x8x8xf32, #tpu.memory_space<vmem>>, vector<1x8x8xf32>,
      %74 = vector.extract_strided_slice %49 {offsets = [0, 72], sizes = [8, 8], strides = [1, 1]} : vector<8x96xf32> to vector<8x8xf32>
      %c1_48 = arith.constant 1 : index
      %c0_49 = arith.constant 0 : index
      %c0_50 = arith.constant 0 : index
      %75 = vector.load %arg10[%c1_48, %c0_49, %c0_50] : memref<4x8x8xf32, #tpu.memory_space<vmem>>, vector<1x8x8xf32>
      %76 = vector.shape_cast %75 : vector<1x8x8xf32> to vector<8x8xf32>
      %77 = vector.shape_cast %74 : vector<8x8xf32> to vector<1x8x8xf32>
      tpu.vector_store %arg10[%c1_48, %c0_49, %c0_50], %77 {strides = array<i32>} : memref<4x8x8xf32, #tpu.memory_space<vmem>>, vector<1x8x8xf32>,
      %78 = vector.extract_strided_slice %49 {offsets = [0, 16], sizes = [8, 8], strides = [1, 1]} : vector<8x96xf32> to vector<8x8xf32>
      %cst_51 = arith.constant 0.353553385 : f32
      %79 = vector.broadcast %cst_51 : f32 to vector<8x8xf32>
      %80 = arith.mulf %78, %79 : vector<8x8xf32>
      %c2 = arith.constant 2 : index
      %c0_52 = arith.constant 0 : index
      %c0_53 = arith.constant 0 : index
      %81 = vector.load %arg8[%c2, %c0_52, %c0_53] : memref<4x8x8xf32, #tpu.memory_space<vmem>>, vector<1x8x8xf32>
      %82 = vector.shape_cast %81 : vector<1x8x8xf32> to vector<8x8xf32>
      %83 = vector.shape_cast %80 : vector<8x8xf32> to vector<1x8x8xf32>
      tpu.vector_store %arg8[%c2, %c0_52, %c0_53], %83 {strides = array<i32>} : memref<4x8x8xf32, #tpu.memory_space<vmem>>, vector<1x8x8xf32>,
      %84 = vector.extract_strided_slice %49 {offsets = [0, 48], sizes = [8, 8], strides = [1, 1]} : vector<8x96xf32> to vector<8x8xf32>
      %c2_54 = arith.constant 2 : index
      %c0_55 = arith.constant 0 : index
      %c0_56 = arith.constant 0 : index
      %85 = vector.load %arg9[%c2_54, %c0_55, %c0_56] : memref<4x8x8xf32, #tpu.memory_space<vmem>>, vector<1x8x8xf32>
      %86 = vector.shape_cast %85 : vector<1x8x8xf32> to vector<8x8xf32>
      %87 = vector.shape_cast %84 : vector<8x8xf32> to vector<1x8x8xf32>
      tpu.vector_store %arg9[%c2_54, %c0_55, %c0_56], %87 {strides = array<i32>} : memref<4x8x8xf32, #tpu.memory_space<vmem>>, vector<1x8x8xf32>,
      %88 = vector.extract_strided_slice %49 {offsets = [0, 80], sizes = [8, 8], strides = [1, 1]} : vector<8x96xf32> to vector<8x8xf32>
      %c2_57 = arith.constant 2 : index
      %c0_58 = arith.constant 0 : index
      %c0_59 = arith.constant 0 : index
      %89 = vector.load %arg10[%c2_57, %c0_58, %c0_59] : memref<4x8x8xf32, #tpu.memory_space<vmem>>, vector<1x8x8xf32>
      %90 = vector.shape_cast %89 : vector<1x8x8xf32> to vector<8x8xf32>
      %91 = vector.shape_cast %88 : vector<8x8xf32> to vector<1x8x8xf32>
      tpu.vector_store %arg10[%c2_57, %c0_58, %c0_59], %91 {strides = array<i32>} : memref<4x8x8xf32, #tpu.memory_space<vmem>>, vector<1x8x8xf32>,
      %92 = vector.extract_strided_slice %49 {offsets = [0, 24], sizes = [8, 8], strides = [1, 1]} : vector<8x96xf32> to vector<8x8xf32>
      %cst_60 = arith.constant 0.353553385 : f32
      %93 = vector.broadcast %cst_60 : f32 to vector<8x8xf32>
      %94 = arith.mulf %92, %93 : vector<8x8xf32>
      %c3 = arith.constant 3 : index
      %c0_61 = arith.constant 0 : index
      %c0_62 = arith.constant 0 : index
      %95 = vector.load %arg8[%c3, %c0_61, %c0_62] : memref<4x8x8xf32, #tpu.memory_space<vmem>>, vector<1x8x8xf32>
      %96 = vector.shape_cast %95 : vector<1x8x8xf32> to vector<8x8xf32>
      %97 = vector.shape_cast %94 : vector<8x8xf32> to vector<1x8x8xf32>
      tpu.vector_store %arg8[%c3, %c0_61, %c0_62], %97 {strides = array<i32>} : memref<4x8x8xf32, #tpu.memory_space<vmem>>, vector<1x8x8xf32>,
      %98 = vector.extract_strided_slice %49 {offsets = [0, 56], sizes = [8, 8], strides = [1, 1]} : vector<8x96xf32> to vector<8x8xf32>
      %c3_63 = arith.constant 3 : index
      %c0_64 = arith.constant 0 : index
      %c0_65 = arith.constant 0 : index
      %99 = vector.load %arg9[%c3_63, %c0_64, %c0_65] : memref<4x8x8xf32, #tpu.memory_space<vmem>>, vector<1x8x8xf32>
      %100 = vector.shape_cast %99 : vector<1x8x8xf32> to vector<8x8xf32>
      %101 = vector.shape_cast %98 : vector<8x8xf32> to vector<1x8x8xf32>
      tpu.vector_store %arg9[%c3_63, %c0_64, %c0_65], %101 {strides = array<i32>} : memref<4x8x8xf32, #tpu.memory_space<vmem>>, vector<1x8x8xf32>,
      %102 = vector.extract_strided_slice %49 {offsets = [0, 88], sizes = [8, 8], strides = [1, 1]} : vector<8x96xf32> to vector<8x8xf32>
      %c3_66 = arith.constant 3 : index
      %c0_67 = arith.constant 0 : index
      %c0_68 = arith.constant 0 : index
      %103 = vector.load %arg10[%c3_66, %c0_67, %c0_68] : memref<4x8x8xf32, #tpu.memory_space<vmem>>, vector<1x8x8xf32>
      %104 = vector.shape_cast %103 : vector<1x8x8xf32> to vector<8x8xf32>
      %105 = vector.shape_cast %102 : vector<8x8xf32> to vector<1x8x8xf32>
      tpu.vector_store %arg10[%c3_66, %c0_67, %c0_68], %105 {strides = array<i32>} : memref<4x8x8xf32, #tpu.memory_space<vmem>>, vector<1x8x8xf32>,
    } else {
    }
    %c8_i32 = arith.constant 8 : i32
    %3 = arith.muli %arg1, %c8_i32 : i32
    %c0 = arith.constant 0 : index
    %c0_1 = arith.constant 0 : index
    %c0_2 = arith.constant 0 : index
    %4 = vector.load %arg8[%c0, %c0_1, %c0_2] : memref<4x8x8xf32, #tpu.memory_space<vmem>>, vector<4x8x8xf32>
    %c0_3 = arith.constant 0 : index
    %c0_4 = arith.constant 0 : index
    %c0_5 = arith.constant 0 : index
    %5 = vector.load %arg9[%c0_3, %c0_4, %c0_5] : memref<4x8x8xf32, #tpu.memory_space<vmem>>, vector<4x8x8xf32>
    %c0_6 = arith.constant 0 : index
    %c0_7 = arith.constant 0 : index
    %c0_8 = arith.constant 0 : index
    %6 = vector.load %arg10[%c0_6, %c0_7, %c0_8] : memref<4x8x8xf32, #tpu.memory_space<vmem>>, vector<4x8x8xf32>
    %cst = arith.constant dense<0.000000e+00> : vector<4x8x8xf32>
    %7 = tpu.matmul %4, %5, %cst {dimension_numbers = #tpu.dot_dimension_numbers<[2], [2], [1], [1], [0, 0, 0, 1, 1, 1], [0], [0]>} : vector<4x8x8xf32>, vector<4x8x8xf32>, vector<4x8x8xf32> -> vector<4x8x8xf32>
    %8 = tpu.iota {dimensions = array<i32: 0>} : vector<8x8xi32>
    %9 = vector.broadcast %3 : i32 to vector<8x8xi32>
    %10 = arith.addi %8, %9 : vector<8x8xi32>
    %11 = tpu.iota {dimensions = array<i32: 1>} : vector<8x8xi32>
    %12 = arith.cmpi sgt, %11, %10 : vector<8x8xi32>
    %cst_9 = arith.constant -1.000000e+09 : f32
    %cst_10 = arith.constant 0.000000e+00 : f32
    %13 = vector.broadcast %cst_9 : f32 to vector<8x8xf32>
    %14 = vector.broadcast %cst_10 : f32 to vector<8x8xf32>
    %15 = arith.select %12, %13, %14 : vector<8x8xi1>, vector<8x8xf32>
    %16 = vector.shape_cast %15 : vector<8x8xf32> to vector<1x8x8xf32>
    %17 = vector.broadcast %16 : vector<1x8x8xf32> to vector<4x8x8xf32>
    %18 = arith.addf %7, %17 : vector<4x8x8xf32>
    %cst_11 = arith.constant dense<0xFF800000> : vector<4x8xf32>
    %19 = vector.multi_reduction <maximumf>, %18, %cst_11 [2] : vector<4x8x8xf32> to vector<4x8xf32>
    %20 = vector.shape_cast %19 : vector<4x8xf32> to vector<4x8x1xf32>
    %21 = vector.broadcast %20 : vector<4x8x1xf32> to vector<4x8x8xf32>
    %22 = arith.subf %18, %21 : vector<4x8x8xf32>
    %23 = math.exp %22 : vector<4x8x8xf32>
    %cst_12 = arith.constant dense<0.000000e+00> : vector<4x8xf32>
    %24 = vector.multi_reduction <add>, %23, %cst_12 [2] : vector<4x8x8xf32> to vector<4x8xf32>
    %25 = vector.shape_cast %24 : vector<4x8xf32> to vector<4x8x1xf32>
    %26 = tpu.reciprocal %25 {approx = true} : vector<4x8x1xf32> -> vector<4x8x1xf32>
    %27 = vector.broadcast %26 : vector<4x8x1xf32> to vector<4x8x8xf32>
    %28 = arith.mulf %23, %27 : vector<4x8x8xf32>
    %cst_13 = arith.constant dense<0.000000e+00> : vector<4x8x8xf32>
    %29 = tpu.matmul %28, %6, %cst_13 {dimension_numbers = #tpu.dot_dimension_numbers<[2], [1], [1], [2], [0, 0, 0, 1, 1, 2], [0], [0]>} : vector<4x8x8xf32>, vector<4x8x8xf32>, vector<4x8x8xf32> -> vector<4x8x8xf32>
    %c0_14 = arith.constant 0 : index
    %c0_15 = arith.constant 0 : index
    %c0_16 = arith.constant 0 : index
    %30 = vector.load %arg5[%c0_14, %c0_15, %c0_16] : memref<4x8x32xf32, #tpu.memory_space<vmem>>, vector<4x8x32xf32>
    %cst_17 = arith.constant dense<0.000000e+00> : vector<4x8x32xf32>
    %31 = tpu.matmul %29, %30, %cst_17 {dimension_numbers = #tpu.dot_dimension_numbers<[2], [1], [1], [2], [0, 0, 0, 1, 1, 2], [0], [0]>} : vector<4x8x8xf32>, vector<4x8x32xf32>, vector<4x8x32xf32> -> vector<4x8x32xf32>
    %cst_18 = arith.constant dense<0.000000e+00> : vector<8x32xf32>
    %32 = vector.multi_reduction <add>, %31, %cst_18 [0] : vector<4x8x32xf32> to vector<8x32xf32>
    %c0_19 = arith.constant 0 : index
    %c0_20 = arith.constant 0 : index
    %33 = vector.load %arg6[%c0_19, %c0_20] : memref<1x32xf32, #tpu.memory_space<vmem>>, vector<1x32xf32>
    %34 = vector.shape_cast %33 : vector<1x32xf32> to vector<32xf32>
    %35 = vector.shape_cast %34 : vector<32xf32> to vector<1x32xf32>
    %36 = vector.broadcast %35 : vector<1x32xf32> to vector<8x32xf32>
    %37 = arith.addf %32, %36 : vector<8x32xf32>
    %c0_21 = arith.constant 0 : index
    %c0_22 = arith.constant 0 : index
    %c0_23 = arith.constant 0 : index
    %38 = vector.load %arg7[%c0_21, %c0_22, %c0_23] : memref<1x8x32xf32, #tpu.memory_space<vmem>>, vector<1x8x32xf32>
    %39 = vector.shape_cast %38 : vector<1x8x32xf32> to vector<8x32xf32>
    %40 = vector.shape_cast %37 : vector<8x32xf32> to vector<1x8x32xf32>
    tpu.vector_store %arg7[%c0_21, %c0_22, %c0_23], %40 {strides = array<i32>} : memref<1x8x32xf32, #tpu.memory_space<vmem>>, vector<1x8x32xf32>,
    return
  }
  func.func @transform_0(%arg0: i32, %arg1: i32) -> (i32, i32, i32) {
    %c0_i32 = arith.constant 0 : i32
    %c0_i32_0 = arith.constant 0 : i32
    %c0_i32_1 = arith.constant 0 : i32
    return %arg0, %c0_i32, %c0_i32_0 : i32, i32, i32
  }
  func.func @transform_1(%arg0: i32, %arg1: i32) -> (i32, i32) {
    %c0_i32 = arith.constant 0 : i32
    %c0_i32_0 = arith.constant 0 : i32
    %c0_i32_1 = arith.constant 0 : i32
    return %c0_i32, %c0_i32_0 : i32, i32
  }
  func.func @transform_2(%arg0: i32, %arg1: i32) -> (i32, i32) {
    %c0_i32 = arith.constant 0 : i32
    %c0_i32_0 = arith.constant 0 : i32
    %c0_i32_1 = arith.constant 0 : i32
    return %c0_i32, %c0_i32_0 : i32, i32
  }
  func.func @transform_3(%arg0: i32, %arg1: i32) -> (i32, i32, i32) {
    %c0_i32 = arith.constant 0 : i32
    %c0_i32_0 = arith.constant 0 : i32
    %c0_i32_1 = arith.constant 0 : i32
    %c0_i32_2 = arith.constant 0 : i32
    return %c0_i32, %c0_i32_0, %c0_i32_1 : i32, i32, i32
  }
  func.func @transform_4(%arg0: i32, %arg1: i32) -> (i32, i32) {
    %c0_i32 = arith.constant 0 : i32
    %c0_i32_0 = arith.constant 0 : i32
    %c0_i32_1 = arith.constant 0 : i32
    return %c0_i32, %c0_i32_0 : i32, i32
  }
  func.func @transform_5(%arg0: i32, %arg1: i32) -> (i32, i32, i32) {
    %c0_i32 = arith.constant 0 : i32
    %c0_i32_0 = arith.constant 0 : i32
    return %arg0, %arg1, %c0_i32 : i32, i32, i32
  }
}

</mosaic_0001>

<llo_original>
// kernel: tpu_custom_call.1
$region0: #{tpu_custom_call.1}
  #allocation0 [shape = 'u32[]', space=smem, size = 0x4, offset = 0x4, fixed_abs, tag = 'smem constant byte address 0x4 - core index']
  #allocation1 [shape = 'u32[72,128]{1,0:T(1,128)}', space=vmem, size = 0x9000, scoped, tag = 'internal scratch']
  #allocation2 [shape = 'f32[4,8,8]{2,1,0:T(8,128)}', space=vmem, size = 0x4000, scoped, tag = 'scratch operand']
  #allocation3 [shape = 'f32[4,8,8]{2,1,0:T(8,128)}', space=vmem, size = 0x4000, scoped, tag = 'scratch operand']
  #allocation4 [shape = 'f32[4,8,8]{2,1,0:T(8,128)}', space=vmem, size = 0x4000, scoped, tag = 'scratch operand']
  %s0 = inlined_call_operand.hbm [shape: f32[2,8,32], index: 0, kind: input, shape index: {}]
  %s1 = inlined_call_operand.hbm [shape: f32[32,96], index: 1, kind: input, shape index: {}]
  %s2 = inlined_call_operand.vmem [shape: f32[1,96], index: 2, kind: input, shape index: {}]
  %s3 = inlined_call_operand.hbm [shape: f32[4,8,32], index: 3, kind: input, shape index: {}]
  %s4 = inlined_call_operand.vmem [shape: f32[1,32], index: 4, kind: input, shape index: {}]
  %s5 = inlined_call_operand.hbm [shape: f32[2,8,32], index: 5, kind: output, shape index: {}]
  %s6 = sld [smem:[#allocation0]]
  $region69: #{tpu_custom_call.1} parent=0
    _
  %s8 = ssub.s32 1, %s6
  %s9 = scalar_select 0, %s8, %s6
  $region1: #{tpu_custom_call.1} parent=0
    #allocation5 [shape = 'u8[8192]{0}', space=vmem, size = 0x2000, scoped, tag = 'input window, operand 0']
    #allocation6 [shape = 's32[2]{0}', space=sflag, size = 0x8, scoped, tag = 'scoped memory for tpu_custom_call.1']
    #allocation7 [shape = 's32[2]{0}', space=sflag, size = 0x8, scoped, tag = 'scoped memory for tpu_custom_call.1']
    #allocation8 [shape = 'u8[16384]{0}', space=vmem, size = 0x4000, scoped, tag = 'input window, operand 1, single buffered']
    #allocation9 [shape = 's32[1]{0}', space=sflag, size = 0x4, scoped, tag = 'scoped memory for tpu_custom_call.1']
    #allocation10 [shape = 'u8[16384]{0}', space=vmem, size = 0x4000, scoped, tag = 'input window, operand 3, single buffered']
    #allocation11 [shape = 'u8[8192]{0}', space=vmem, size = 0x2000, scoped, tag = 'output window, operand 0']
    %10 = vsyncpa [#allocation6], 0
    %s11 = scalar_lea.sflag [#allocation6], 1
    %12 = vsyncpa %s11, 0
    %13 = vsyncpa [#allocation9], 0
    %14 = vsyncpa [#allocation7], 0
    %s15 = scalar_lea.sflag [#allocation7], 1
    %16 = vsyncpa %s15, 0
    loop: start=0, step=1, limit=4
    $region2: #{tpu_custom_call.1} parent=1 // loop_pre_header
      _
    $region3: #{tpu_custom_call.1} parent=1 // loop_header
      %s18 = sphi 0, %s22
      %p19 = scmp.ge.s32.totalorder %s18, 4
      %s25 = sphi 0, %s37
      %s26 = sphi 0, %s33
      %s27 = sphi 0, %s25
      %s28 = sphi 0, %s26
      %s29 = sphi 0, %s27
      %s30 = sphi 0, %s28
      %s40 = sphi 0, %s42
      %s43 = sphi 0, %s40
      %s44 = sphi 0, %s43
      %s60 = sphi 0, %s44
      %s64 = sphi 0, %s64
      %s66 = sphi 0, %s64
      %s67 = sphi 0, %s66
      %s81 = sphi 0, %s67
      %s85 = sphi 0, %s85
      %s87 = sphi 0, %s85
      %s88 = sphi 0, %s87
      %s102 = sphi 0, %s88
      %s106 = sphi 0, %s106
      %s108 = sphi 0, %s106
      %s109 = sphi 0, %s108
      %s123 = sphi 0, %s109
      %s127 = sphi 0, %s127
      %s129 = sphi 0, %s127
      %s130 = sphi 0, %s129
      %s144 = sphi 0, %s130
      %s152 = sphi 0, %s154
      %s155 = sphi 0, %s152
      %s156 = sphi 0, %s155
      %s172 = sphi 0, %s156
    $region4: #{tpu_custom_call.1} parent=1 // loop_header_branch
      %21 = sbr.rel (%p19) target = $region8
    $region5: #{tpu_custom_call.1} parent=1 // loop_body
      %s23 = ssub.s32 %s18, 1
      %s24 = ssub.s32 %s18, 2
      %s31 = sadd.s32 1, %s26
      %p32 = scmp.ge.s32.totalorder %s31, 1
      %s33 = scalar_select %p32, 0, %s31
      %s34 = sadd.s32 1, %s25
      %s35 = scalar_select %p32, %s34, %s25
      %p36 = scmp.ge.s32.totalorder %s35, 2
      %s37 = scalar_select %p36, 0, %s35
      %s38 = ssub.s32 %s25, %s37
      %p39 = scmp.eq.s32.totalorder %s38, 0
      %s41 = sadd.s32 %s40, 1
      %s42 = scalar_select %p39, %s40, %s41
      %p45 = pneg %p39
      %p46 = scmp.eq.s32.totalorder %s18, 1
      %p47 = por %p45, %p46
      %p48 = scmp.ne.s32.totalorder %s40, %s43
      %p49 = scmp.eq.s32.totalorder %s18, 0
      %p50 = por %p48, %p49
      %p51 = scmp.ne.s32.totalorder %s40, %s43
      %p52 = scmp.eq.s32.totalorder %s23, 1
      %p53 = por %p51, %p52
      %p54 = scmp.ne.s32.totalorder %s43, %s44
      %p55 = scmp.eq.s32.totalorder %s23, 0
      %p56 = por %p54, %p55
      %p57 = scmp.ne.s32.totalorder %s43, %s44
      %p58 = scmp.eq.s32.totalorder %s24, 1
      %p59 = por %p57, %p58
      %p61 = scmp.ne.s32.totalorder %s44, %s60
      %p62 = scmp.eq.s32.totalorder %s24, 0
      %p63 = por %p61, %p62
      %s65 = sadd.s32 %s64, 1
      %p68 = scmp.eq.s32.totalorder %s18, 1
      %p69 = scmp.ne.s32.totalorder %s64, %s66
      %p70 = scmp.eq.s32.totalorder %s18, 0
      %p71 = por %p69, %p70
      %p72 = scmp.ne.s32.totalorder %s64, %s66
      %p73 = scmp.eq.s32.totalorder %s23, 1
      %p74 = por %p72, %p73
      %p75 = scmp.ne.s32.totalorder %s66, %s67
      %p76 = scmp.eq.s32.totalorder %s23, 0
      %p77 = por %p75, %p76
      %p78 = scmp.ne.s32.totalorder %s66, %s67
      %p79 = scmp.eq.s32.totalorder %s24, 1
      %p80 = por %p78, %p79
      %p82 = scmp.ne.s32.totalorder %s67, %s81
      %p83 = scmp.eq.s32.totalorder %s24, 0
      %p84 = por %p82, %p83
      %s86 = sadd.s32 %s85, 1
      %p89 = scmp.eq.s32.totalorder %s18, 1
      %p90 = scmp.ne.s32.totalorder %s85, %s87
      %p91 = scmp.eq.s32.totalorder %s18, 0
      %p92 = por %p90, %p91
      %p93 = scmp.ne.s32.totalorder %s85, %s87
      %p94 = scmp.eq.s32.totalorder %s23, 1
      %p95 = por %p93, %p94
      %p96 = scmp.ne.s32.totalorder %s87, %s88
      %p97 = scmp.eq.s32.totalorder %s23, 0
      %p98 = por %p96, %p97
      %p99 = scmp.ne.s32.totalorder %s87, %s88
      %p100 = scmp.eq.s32.totalorder %s24, 1
      %p101 = por %p99, %p100
      %p103 = scmp.ne.s32.totalorder %s88, %s102
      %p104 = scmp.eq.s32.totalorder %s24, 0
      %p105 = por %p103, %p104
      %s107 = sadd.s32 %s106, 1
      %p110 = scmp.eq.s32.totalorder %s18, 1
      %p111 = scmp.ne.s32.totalorder %s106, %s108
      %p112 = scmp.eq.s32.totalorder %s18, 0
      %p113 = por %p111, %p112
      %p114 = scmp.ne.s32.totalorder %s106, %s108
      %p115 = scmp.eq.s32.totalorder %s23, 1
      %p116 = por %p114, %p115
      %p117 = scmp.ne.s32.totalorder %s108, %s109
      %p118 = scmp.eq.s32.totalorder %s23, 0
      %p119 = por %p117, %p118
      %p120 = scmp.ne.s32.totalorder %s108, %s109
      %p121 = scmp.eq.s32.totalorder %s24, 1
      %p122 = por %p120, %p121
      %p124 = scmp.ne.s32.totalorder %s109, %s123
      %p125 = scmp.eq.s32.totalorder %s24, 0
      %p126 = por %p124, %p125
      %s128 = sadd.s32 %s127, 1
      %p131 = scmp.eq.s32.totalorder %s18, 1
      %p132 = scmp.ne.s32.totalorder %s127, %s129
      %p133 = scmp.eq.s32.totalorder %s18, 0
      %p134 = por %p132, %p133
      %p135 = scmp.ne.s32.totalorder %s127, %s129
      %p136 = scmp.eq.s32.totalorder %s23, 1
      %p137 = por %p135, %p136
      %p138 = scmp.ne.s32.totalorder %s129, %s130
      %p139 = scmp.eq.s32.totalorder %s23, 0
      %p140 = por %p138, %p139
      %p141 = scmp.ne.s32.totalorder %s129, %s130
      %p142 = scmp.eq.s32.totalorder %s24, 1
      %p143 = por %p141, %p142
      %p145 = scmp.ne.s32.totalorder %s130, %s144
      %p146 = scmp.eq.s32.totalorder %s24, 0
      %p147 = por %p145, %p146
      %s148 = ssub.s32 %s25, %s37
      %s149 = ssub.s32 %s26, %s33
      %s150 = sor.u32 %s148, %s149
      %p151 = scmp.eq.s32.totalorder %s150, 0
      %s153 = sadd.s32 %s152, 1
      %s154 = scalar_select %p151, %s152, %s153
      %p157 = pneg %p151
      %p158 = scmp.eq.s32.totalorder %s18, 1
      %p159 = por %p157, %p158
      %p160 = scmp.ne.s32.totalorder %s152, %s155
      %p161 = scmp.eq.s32.totalorder %s18, 0
      %p162 = por %p160, %p161
      %p163 = scmp.ne.s32.totalorder %s152, %s155
      %p164 = scmp.eq.s32.totalorder %s23, 1
      %p165 = por %p163, %p164
      %p166 = scmp.ne.s32.totalorder %s155, %s156
      %p167 = scmp.eq.s32.totalorder %s23, 0
      %p168 = por %p166, %p167
      %p169 = scmp.ne.s32.totalorder %s155, %s156
      %p170 = scmp.eq.s32.totalorder %s24, 1
      %p171 = por %p169, %p170
      %p173 = scmp.ne.s32.totalorder %s156, %s172
      %p174 = scmp.eq.s32.totalorder %s24, 0
      %p175 = por %p173, %p174
      %p176 = scmp.le.s32.totalorder 1, %s18
      %p177 = scmp.lt.s32.totalorder %s18, 3
      %p178 = pnand %p176, %p177
      %p179 = pneg %p178
      // Predicated region
      $region9: #{tpu_custom_call.1} parent=5 // pred_check
        _
      $region10: #{tpu_custom_call.1} parent=5 // pred_check_branch
        %181 = sbr.rel (%p178) target = $region12
      $region11: #{tpu_custom_call.1} parent=5 // pred_region
        %s182 = ssub.s32 %s18, 1
        // Predicated region
        $region13: #{tpu_custom_call.1} parent=11 // pred_check
          %p183 = pneg %p77
        $region14: #{tpu_custom_call.1} parent=11 // pred_check_branch
          %185 = sbr.rel (%p183) target = $region16
        $region15: #{tpu_custom_call.1} parent=11 // pred_region
          %187 = vsyncadd [#allocation9], 0
          %s188 = sshll.u32 %s1, 4
          %s189 = int_to_ptr.hbm [resolvable:$true] %s188
          %s190 = sshll.u32 [#allocation8], 4
          %s191 = int_to_ptr.vmem [resolvable:$true] %s190
          %196 = dma.hbm_to_vmem [thread:$0]  %s189, 512, %s191, [#allocation9], 128, 128, 8
        $region16: #{tpu_custom_call.1} parent=11 // pred_fallthru
          _
        // Predicated region
        $region17: #{tpu_custom_call.1} parent=11 // pred_check
          %p197 = pneg %p98
        $region18: #{tpu_custom_call.1} parent=11 // pred_check_branch
          %199 = sbr.rel (%p197) target = $region20
        $region19: #{tpu_custom_call.1} parent=11 // pred_region
          _
        $region20: #{tpu_custom_call.1} parent=11 // pred_fallthru
          _
        // Predicated region
        $region21: #{tpu_custom_call.1} parent=11 // pred_check
          %p200 = pneg %p119
        $region22: #{tpu_custom_call.1} parent=11 // pred_check_branch
          %202 = sbr.rel (%p200) target = $region24
        $region23: #{tpu_custom_call.1} parent=11 // pred_region
          %204 = vsyncadd [#allocation9], 0
          %s205 = sshll.u32 %s3, 4
          %s206 = int_to_ptr.hbm [resolvable:$true] %s205
          %s207 = sshll.u32 [#allocation10], 4
          %s208 = int_to_ptr.vmem [resolvable:$true] %s207
          %213 = dma.hbm_to_vmem [thread:$0]  %s206, 512, %s208, [#allocation9], 128, 128, 8
        $region24: #{tpu_custom_call.1} parent=11 // pred_fallthru
          _
        // Predicated region
        $region25: #{tpu_custom_call.1} parent=11 // pred_check
          %p214 = pneg %p140
        $region26: #{tpu_custom_call.1} parent=11 // pred_check_branch
          %216 = sbr.rel (%p214) target = $region28
        $region27: #{tpu_custom_call.1} parent=11 // pred_region
          _
        $region28: #{tpu_custom_call.1} parent=11 // pred_fallthru
          _
      $region12: #{tpu_custom_call.1} parent=5 // pred_fallthru
        _
      %p217 = scmp.lt.s32.totalorder %s18, 2
      // Predicated region
      $region29: #{tpu_custom_call.1} parent=5 // pred_check
        %p218 = pneg %p217
      $region30: #{tpu_custom_call.1} parent=5 // pred_check_branch
        %220 = sbr.rel (%p218) target = $region32
      $region31: #{tpu_custom_call.1} parent=5 // pred_region
        // Predicated region
        $region33: #{tpu_custom_call.1} parent=31 // pred_check
          %p221 = pneg %p50
        $region34: #{tpu_custom_call.1} parent=31 // pred_check_branch
          %223 = sbr.rel (%p221) target = $region36
        $region35: #{tpu_custom_call.1} parent=31 // pred_region
          %s224 = sand.u32 %s40, 1
          %s225 = scalar_lea.sflag [#allocation6], %s224
          %s226 = sand.u32 %s40, 1
          %s227 = smul.addr %s226, 8
          %s228 = scalar_lea.vmem [#allocation5], %s227
          %230 = vsyncadd %s225, 0
          %s231 = smul.addr %s25, 8
          %s232 = scalar_lea.hbm %s0, %s231
          %s234 = sshll.u32 %s232, 4
          %s235 = int_to_ptr.hbm [resolvable:$true] %s234
          %s236 = sshll.u32 %s228, 4
          %s237 = int_to_ptr.vmem [resolvable:$true] %s236
          %239 = dma.hbm_to_vmem [thread:$0]  %s235, 128, %s237, %s225
        $region36: #{tpu_custom_call.1} parent=31 // pred_fallthru
          _
      $region32: #{tpu_custom_call.1} parent=5 // pred_fallthru
        _
      %p240 = scmp.le.s32.totalorder 1, %s18
      %p241 = scmp.lt.s32.totalorder %s18, 3
      %p242 = pnand %p240, %p241
      %p243 = pneg %p242
      // Predicated region
      $region37: #{tpu_custom_call.1} parent=5 // pred_check
        _
      $region38: #{tpu_custom_call.1} parent=5 // pred_check_branch
        %245 = sbr.rel (%p242) target = $region40
      $region39: #{tpu_custom_call.1} parent=5 // pred_region
        %s246 = ssub.s32 %s18, 1
        %s247 = sand.u32 %s43, 1
        %s248 = scalar_lea.sflag [#allocation6], %s247
        %s249 = sand.u32 %s43, 1
        %s250 = smul.addr %s249, 8
        %s251 = scalar_lea.vmem [#allocation5], %s250
        // Predicated region
        $region41: #{tpu_custom_call.1} parent=39 // pred_check
          %p252 = pneg %p56
        $region42: #{tpu_custom_call.1} parent=39 // pred_check_branch
          %254 = sbr.rel (%p252) target = $region44
        $region43: #{tpu_custom_call.1} parent=39 // pred_region
          %256 = dma.done %s248, 128
        $region44: #{tpu_custom_call.1} parent=39 // pred_fallthru
          _
        // Predicated region
        $region45: #{tpu_custom_call.1} parent=39 // pred_check
          %p257 = pneg %p77
        $region46: #{tpu_custom_call.1} parent=39 // pred_check_branch
          %259 = sbr.rel (%p257) target = $region48
        $region47: #{tpu_custom_call.1} parent=39 // pred_region
          %261 = dma.done [#allocation9], 512
        $region48: #{tpu_custom_call.1} parent=39 // pred_fallthru
          _
        // Predicated region
        $region49: #{tpu_custom_call.1} parent=39 // pred_check
          %p262 = pneg %p119
        $region50: #{tpu_custom_call.1} parent=39 // pred_check_branch
          %264 = sbr.rel (%p262) target = $region52
        $region51: #{tpu_custom_call.1} parent=39 // pred_region
          %266 = dma.done [#allocation9], 512
        $region52: #{tpu_custom_call.1} parent=39 // pred_fallthru
          _
        %s267 = sand.u32 %s43, 1
        %s268 = scalar_lea.sflag [#allocation6], %s267
        %s269 = sand.u32 %s43, 1
        %s270 = smul.addr %s269, 8
        %s271 = scalar_lea.vmem [#allocation5], %s270
        %p272 = pneg %p56
        %p273 = pneg %p53
        %p274 = pneg %p77
        %p275 = pneg %p74
        %p276 = pneg %p98
        %p277 = pneg %p95
        %p278 = pneg %p119
        %p279 = pneg %p116
        %p280 = pneg %p140
        %p281 = pneg %p137
        %p282 = pneg %p168
        %p283 = pneg %p165
        %s284 = sand.u32 %s155, 1
        %s285 = scalar_lea.sflag [#allocation7], %s284
        %s286 = sand.u32 %s155, 1
        %s287 = smul.addr %s286, 8
        %s288 = scalar_lea.vmem [#allocation11], %s287
        %p289 = scmp.eq.s32.totalorder %s28, 0
        // Predicated region
        $region53: #{tpu_custom_call.1} parent=39 // pred_check
          %p290 = pneg %p289
        $region54: #{tpu_custom_call.1} parent=39 // pred_check_branch
          %292 = sbr.rel (%p290) target = $region56
        $region55: #{tpu_custom_call.1} parent=39 // pred_region
          %v293 = vld [vmem:[%s251] sm:$0xff]
          %v294 = vld [vmem:[#allocation8] sm:$0xff]
          %v295 = vld [vmem:[#allocation8 + $0x8] sm:$0xff]
          %v296 = vld [vmem:[#allocation8 + $0x10] sm:$0xff]
          %v297 = vld [vmem:[#allocation8 + $0x18] sm:$0xff]
          %v298 = vld [vmem:[%s2] sm:$0x1]
          %v300 = vperm.slane %v298, 0
          %vm302 = vcmask 261120
          %v304 = vsel %vm302, %v293, 0
          %306 = vmatpush.msra.mxu0 0.0
          %307 = vmatpush.msra.mxu0 0.0
          %308 = vmatpush.msra.mxu0 0.0
          %309 = vmatpush.msra.mxu0 0.0
          %310 = vmatpush.msra.mxu0 0.0
          %311 = vmatpush.msra.mxu0 0.0
          %312 = vmatpush.msra.mxu0 0.0
          %313 = vmatpush.msra.mxu0 0.0
          %314 = vmatpush.msra.mxu0 0.0
          %315 = vmatpush.msra.mxu0 0.0
          %316 = vmatpush.msra.mxu0 0.0
          %317 = vmatpush.msra.mxu0 0.0
          %318 = vmatpush.msra.mxu0 %v297
          %319 = vmatpush.msra.mxu0 %v296
          %320 = vmatpush.msra.mxu0 %v295
          %321 = vmatpush.msra.mxu0 %v294
          %322 = vmatmul.f32.gmra.mxu0 %v304
          %v323 = vpop.f32.mrf.mxu0
          %v324 = vadd.f32 %v300, %v323
          %325 = vdwg.mxu0
          %v326 = vmul.f32 %v324, 0.35355338
          %vm327 = vcmask 64512
          %328 = vst.msk [vmem:[#allocation2] sm:$0xff] %vm327, %v326
          %330 = vrot.lane.b32.xlu0 %v324, 96
          %v331 = vpop.permute.xlu0 %330
          %333 = vst.msk [vmem:[#allocation3] sm:$0xff] %vm327, %v331
          %334 = vrot.lane.b32.xlu0 %v324, 64
          %v335 = vpop.permute.xlu0 %334
          %337 = vst.msk [vmem:[#allocation4] sm:$0xff] %vm327, %v335
          %339 = vrot.lane.b32.xlu0 %v326, 120
          %v340 = vpop.permute.xlu0 %339
          %s342 = scalar_lea.vmem [#allocation2], 8
          %343 = vst.msk [vmem:[%s342] sm:$0xff] %vm327, %v340
          %344 = vrot.lane.b32.xlu0 %v324, 88
          %v345 = vpop.permute.xlu0 %344
          %s347 = scalar_lea.vmem [#allocation3], 8
          %348 = vst.msk [vmem:[%s347] sm:$0xff] %vm327, %v345
          %349 = vrot.lane.b32.xlu0 %v324, 56
          %v350 = vpop.permute.xlu0 %349
          %s352 = scalar_lea.vmem [#allocation4], 8
          %353 = vst.msk [vmem:[%s352] sm:$0xff] %vm327, %v350
          %354 = vrot.lane.b32.xlu0 %v326, 112
          %v355 = vpop.permute.xlu0 %354
          %s357 = scalar_lea.vmem [#allocation2], 16
          %358 = vst.msk [vmem:[%s357] sm:$0xff] %vm327, %v355
          %359 = vrot.lane.b32.xlu0 %v324, 80
          %v360 = vpop.permute.xlu0 %359
          %s362 = scalar_lea.vmem [#allocation3], 16
          %363 = vst.msk [vmem:[%s362] sm:$0xff] %vm327, %v360
          %364 = vrot.lane.b32.xlu0 %v324, 48
          %v365 = vpop.permute.xlu0 %364
          %s367 = scalar_lea.vmem [#allocation4], 16
          %368 = vst.msk [vmem:[%s367] sm:$0xff] %vm327, %v365
          %369 = vrot.lane.b32.xlu0 %v326, 104
          %v370 = vpop.permute.xlu0 %369
          %s372 = scalar_lea.vmem [#allocation2], 24
          %373 = vst.msk [vmem:[%s372] sm:$0xff] %vm327, %v370
          %374 = vrot.lane.b32.xlu0 %v324, 72
          %v375 = vpop.permute.xlu0 %374
          %s377 = scalar_lea.vmem [#allocation3], 24
          %378 = vst.msk [vmem:[%s377] sm:$0xff] %vm327, %v375
          %379 = vrot.lane.b32.xlu0 %v324, 40
          %v380 = vpop.permute.xlu0 %379
          %s382 = scalar_lea.vmem [#allocation4], 24
          %383 = vst.msk [vmem:[%s382] sm:$0xff] %vm327, %v380
        $region56: #{tpu_custom_call.1} parent=39 // pred_fallthru
          _
        %s384 = smul.u32 %s28, 8
        %v385 = vld [vmem:[#allocation2] sm:$0xff]
        %v386 = vld [vmem:[#allocation2 + $0x8] sm:$0xff]
        %v387 = vld [vmem:[#allocation2 + $0x10] sm:$0xff]
        %v388 = vld [vmem:[#allocation2 + $0x18] sm:$0xff]
        %v389 = vld [vmem:[#allocation3] sm:$0xff]
        %v390 = vld [vmem:[#allocation3 + $0x8] sm:$0xff]
        %v391 = vld [vmem:[#allocation3 + $0x10] sm:$0xff]
        %v392 = vld [vmem:[#allocation3 + $0x18] sm:$0xff]
        %v393 = vld [vmem:[#allocation4] sm:$0xff]
        %v394 = vld [vmem:[#allocation4 + $0x8] sm:$0xff]
        %v395 = vld [vmem:[#allocation4 + $0x10] sm:$0xff]
        %v396 = vld [vmem:[#allocation4 + $0x18] sm:$0xff]
        %v397 = vlaneseq
        %v398 = vshrl.u32 %v397, 7
        %v399 = vstv %s384
        %v400 = vadd.s32 %v398, %v399
        %v401 = vlaneseq
        %v402 = vand.u32 %v401, 127
        %vm403 = vcmp.gt.s32.totalorder %v402, %v400
        %v404 = vsel %vm403, -1e+09, 0.0
        %vm405 = vcmask 64512
        %v407 = vsel %vm405, %v385, 0
        %v410 = vsel %vm405, %v389, 0
        %412 = vmatpush.xpose.msra.mxu0 0.0
        %413 = vmatpush.xpose.msra.mxu0 0.0
        %414 = vmatpush.xpose.msra.mxu0 0.0
        %415 = vmatpush.xpose.msra.mxu0 0.0
        %416 = vmatpush.xpose.msra.mxu0 0.0
        %417 = vmatpush.xpose.msra.mxu0 0.0
        %418 = vmatpush.xpose.msra.mxu0 0.0
        %419 = vmatpush.xpose.msra.mxu0 0.0
        %420 = vmatpush.xpose.msra.mxu0 0.0
        %421 = vmatpush.xpose.msra.mxu0 0.0
        %422 = vmatpush.xpose.msra.mxu0 0.0
        %423 = vmatpush.xpose.msra.mxu0 0.0
        %424 = vmatpush.xpose.msra.mxu0 0.0
        %425 = vmatpush.xpose.msra.mxu0 0.0
        %426 = vmatpush.xpose.msra.mxu0 0.0
        %427 = vmatpush.xpose.msra.mxu0 %v410
        %428 = vmatmul.f32.gmra.mxu0 %v407
        %v429 = vpop.f32.mrf.mxu0
        %v430 = vadd.f32 %v404, %v429
        %431 = vdwg.mxu0
        %v433 = vsel %vm405, %v386, 0
        %v436 = vsel %vm405, %v390, 0
        %438 = vmatpush.xpose.msra.mxu0 0.0
        %439 = vmatpush.xpose.msra.mxu0 0.0
        %440 = vmatpush.xpose.msra.mxu0 0.0
        %441 = vmatpush.xpose.msra.mxu0 0.0
        %442 = vmatpush.xpose.msra.mxu0 0.0
        %443 = vmatpush.xpose.msra.mxu0 0.0
        %444 = vmatpush.xpose.msra.mxu0 0.0
        %445 = vmatpush.xpose.msra.mxu0 0.0
        %446 = vmatpush.xpose.msra.mxu0 0.0
        %447 = vmatpush.xpose.msra.mxu0 0.0
        %448 = vmatpush.xpose.msra.mxu0 0.0
        %449 = vmatpush.xpose.msra.mxu0 0.0
        %450 = vmatpush.xpose.msra.mxu0 0.0
        %451 = vmatpush.xpose.msra.mxu0 0.0
        %452 = vmatpush.xpose.msra.mxu0 0.0
        %453 = vmatpush.xpose.msra.mxu0 %v436
        %454 = vmatmul.f32.gmra.mxu0 %v433
        %v455 = vpop.f32.mrf.mxu0
        %v456 = vadd.f32 %v404, %v455
        %457 = vdwg.mxu0
        %v459 = vsel %vm405, %v387, 0
        %v462 = vsel %vm405, %v391, 0
        %464 = vmatpush.xpose.msra.mxu0 0.0
        %465 = vmatpush.xpose.msra.mxu0 0.0
        %466 = vmatpush.xpose.msra.mxu0 0.0
        %467 = vmatpush.xpose.msra.mxu0 0.0
        %468 = vmatpush.xpose.msra.mxu0 0.0
        %469 = vmatpush.xpose.msra.mxu0 0.0
        %470 = vmatpush.xpose.msra.mxu0 0.0
        %471 = vmatpush.xpose.msra.mxu0 0.0
        %472 = vmatpush.xpose.msra.mxu0 0.0
        %473 = vmatpush.xpose.msra.mxu0 0.0
        %474 = vmatpush.xpose.msra.mxu0 0.0
        %475 = vmatpush.xpose.msra.mxu0 0.0
        %476 = vmatpush.xpose.msra.mxu0 0.0
        %477 = vmatpush.xpose.msra.mxu0 0.0
        %478 = vmatpush.xpose.msra.mxu0 0.0
        %479 = vmatpush.xpose.msra.mxu0 %v462
        %480 = vmatmul.f32.gmra.mxu0 %v459
        %v481 = vpop.f32.mrf.mxu0
        %v482 = vadd.f32 %v404, %v481
        %483 = vdwg.mxu0
        %v485 = vsel %vm405, %v388, 0
        %v488 = vsel %vm405, %v392, 0
        %490 = vmatpush.xpose.msra.mxu0 0.0
        %491 = vmatpush.xpose.msra.mxu0 0.0
        %492 = vmatpush.xpose.msra.mxu0 0.0
        %493 = vmatpush.xpose.msra.mxu0 0.0
        %494 = vmatpush.xpose.msra.mxu0 0.0
        %495 = vmatpush.xpose.msra.mxu0 0.0
        %496 = vmatpush.xpose.msra.mxu0 0.0
        %497 = vmatpush.xpose.msra.mxu0 0.0
        %498 = vmatpush.xpose.msra.mxu0 0.0
        %499 = vmatpush.xpose.msra.mxu0 0.0
        %500 = vmatpush.xpose.msra.mxu0 0.0
        %501 = vmatpush.xpose.msra.mxu0 0.0
        %502 = vmatpush.xpose.msra.mxu0 0.0
        %503 = vmatpush.xpose.msra.mxu0 0.0
        %504 = vmatpush.xpose.msra.mxu0 0.0
        %505 = vmatpush.xpose.msra.mxu0 %v488
        %506 = vmatmul.f32.gmra.mxu0 %v485
        %v507 = vpop.f32.mrf.mxu0
        %v508 = vadd.f32 %v404, %v507
        %509 = vdwg.mxu0
        %v510 = vsel %vm405, %v430, -inf
        %511 = vmax.xlane.f32.xlu0 %v510
        %v512 = vpop.xlane.xlu0 %511
        %v513 = vsel %vm405, %v456, -inf
        %514 = vmax.xlane.f32.xlu0 %v513
        %v515 = vpop.xlane.xlu0 %514
        %v516 = vsel %vm405, %v482, -inf
        %517 = vmax.xlane.f32.xlu0 %v516
        %v518 = vpop.xlane.xlu0 %517
        %v519 = vsel %vm405, %v508, -inf
        %520 = vmax.xlane.f32.xlu0 %v519
        %v521 = vpop.xlane.xlu0 %520
        %v522 = vsub.f32 %v430, %v512
        %v523 = vsub.f32 %v456, %v515
        %v524 = vsub.f32 %v482, %v518
        %v525 = vsub.f32 %v508, %v521
        %v526 = vmul.f32 %v522, 1.442695
        %v527 = vpow.pop %v526
        %v528 = vmul.f32 %v523, 1.442695
        %v529 = vpow.pop %v528
        %v530 = vmul.f32 %v524, 1.442695
        %v531 = vpow.pop %v530
        %v532 = vmul.f32 %v525, 1.442695
        %v533 = vpow.pop %v532
        %v534 = vsel %vm405, %v527, 0.0
        %535 = vadd.xlane.f32.xlu0 %v534
        %v536 = vpop.xlane.xlu0 %535
        %v537 = vsel %vm405, %v529, 0.0
        %538 = vadd.xlane.f32.xlu0 %v537
        %v539 = vpop.xlane.xlu0 %538
        %v540 = vsel %vm405, %v531, 0.0
        %541 = vadd.xlane.f32.xlu0 %v540
        %v542 = vpop.xlane.xlu0 %541
        %v543 = vsel %vm405, %v533, 0.0
        %544 = vadd.xlane.f32.xlu0 %v543
        %v545 = vpop.xlane.xlu0 %544
        %v546 = vrcp.pop %v536
        %v547 = vrcp.pop %v539
        %v548 = vrcp.pop %v542
        %v549 = vrcp.pop %v545
        %v550 = vmul.f32 %v527, %v546
        %v551 = vmul.f32 %v529, %v547
        %v552 = vmul.f32 %v531, %v548
        %v553 = vmul.f32 %v533, %v549
        %v555 = vsel %vm405, %v550, 0
        %557 = vmatpush.msra.mxu0 0.0
        %558 = vmatpush.msra.mxu0 0.0
        %559 = vmatpush.msra.mxu0 0.0
        %560 = vmatpush.msra.mxu0 0.0
        %561 = vmatpush.msra.mxu0 0.0
        %562 = vmatpush.msra.mxu0 0.0
        %563 = vmatpush.msra.mxu0 0.0
        %564 = vmatpush.msra.mxu0 0.0
        %565 = vmatpush.msra.mxu0 0.0
        %566 = vmatpush.msra.mxu0 0.0
        %567 = vmatpush.msra.mxu0 0.0
        %568 = vmatpush.msra.mxu0 0.0
        %569 = vmatpush.msra.mxu0 0.0
        %570 = vmatpush.msra.mxu0 0.0
        %571 = vmatpush.msra.mxu0 0.0
        %572 = vmatpush.msra.mxu0 %v393
        %573 = vmatmul.f32.gmra.mxu0 %v555
        %v574 = vpop.f32.mrf.mxu0
        %v575 = vadd.f32 0.0, %v574
        %576 = vdwg.mxu0
        %v578 = vsel %vm405, %v551, 0
        %580 = vmatpush.msra.mxu0 0.0
        %581 = vmatpush.msra.mxu0 0.0
        %582 = vmatpush.msra.mxu0 0.0
        %583 = vmatpush.msra.mxu0 0.0
        %584 = vmatpush.msra.mxu0 0.0
        %585 = vmatpush.msra.mxu0 0.0
        %586 = vmatpush.msra.mxu0 0.0
        %587 = vmatpush.msra.mxu0 0.0
        %588 = vmatpush.msra.mxu0 0.0
        %589 = vmatpush.msra.mxu0 0.0
        %590 = vmatpush.msra.mxu0 0.0
        %591 = vmatpush.msra.mxu0 0.0
        %592 = vmatpush.msra.mxu0 0.0
        %593 = vmatpush.msra.mxu0 0.0
        %594 = vmatpush.msra.mxu0 0.0
        %595 = vmatpush.msra.mxu0 %v394
        %596 = vmatmul.f32.gmra.mxu0 %v578
        %v597 = vpop.f32.mrf.mxu0
        %v598 = vadd.f32 0.0, %v597
        %599 = vdwg.mxu0
        %v601 = vsel %vm405, %v552, 0
        %603 = vmatpush.msra.mxu0 0.0
        %604 = vmatpush.msra.mxu0 0.0
        %605 = vmatpush.msra.mxu0 0.0
        %606 = vmatpush.msra.mxu0 0.0
        %607 = vmatpush.msra.mxu0 0.0
        %608 = vmatpush.msra.mxu0 0.0
        %609 = vmatpush.msra.mxu0 0.0
        %610 = vmatpush.msra.mxu0 0.0
        %611 = vmatpush.msra.mxu0 0.0
        %612 = vmatpush.msra.mxu0 0.0
        %613 = vmatpush.msra.mxu0 0.0
        %614 = vmatpush.msra.mxu0 0.0
        %615 = vmatpush.msra.mxu0 0.0
        %616 = vmatpush.msra.mxu0 0.0
        %617 = vmatpush.msra.mxu0 0.0
        %618 = vmatpush.msra.mxu0 %v395
        %619 = vmatmul.f32.gmra.mxu0 %v601
        %v620 = vpop.f32.mrf.mxu0
        %v621 = vadd.f32 0.0, %v620
        %622 = vdwg.mxu0
        %v624 = vsel %vm405, %v553, 0
        %626 = vmatpush.msra.mxu0 0.0
        %627 = vmatpush.msra.mxu0 0.0
        %628 = vmatpush.msra.mxu0 0.0
        %629 = vmatpush.msra.mxu0 0.0
        %630 = vmatpush.msra.mxu0 0.0
        %631 = vmatpush.msra.mxu0 0.0
        %632 = vmatpush.msra.mxu0 0.0
        %633 = vmatpush.msra.mxu0 0.0
        %634 = vmatpush.msra.mxu0 0.0
        %635 = vmatpush.msra.mxu0 0.0
        %636 = vmatpush.msra.mxu0 0.0
        %637 = vmatpush.msra.mxu0 0.0
        %638 = vmatpush.msra.mxu0 0.0
        %639 = vmatpush.msra.mxu0 0.0
        %640 = vmatpush.msra.mxu0 0.0
        %641 = vmatpush.msra.mxu0 %v396
        %642 = vmatmul.f32.gmra.mxu0 %v624
        %v643 = vpop.f32.mrf.mxu0
        %v644 = vadd.f32 0.0, %v643
        %645 = vdwg.mxu0
        %v646 = vld [vmem:[#allocation10] sm:$0xff]
        %v647 = vld [vmem:[#allocation10 + $0x8] sm:$0xff]
        %v648 = vld [vmem:[#allocation10 + $0x10] sm:$0xff]
        %v649 = vld [vmem:[#allocation10 + $0x18] sm:$0xff]
        %v651 = vsel %vm405, %v575, 0
        %653 = vmatpush.msra.mxu0 0.0
        %654 = vmatpush.msra.mxu0 0.0
        %655 = vmatpush.msra.mxu0 0.0
        %656 = vmatpush.msra.mxu0 0.0
        %657 = vmatpush.msra.mxu0 0.0
        %658 = vmatpush.msra.mxu0 0.0
        %659 = vmatpush.msra.mxu0 0.0
        %660 = vmatpush.msra.mxu0 0.0
        %661 = vmatpush.msra.mxu0 0.0
        %662 = vmatpush.msra.mxu0 0.0
        %663 = vmatpush.msra.mxu0 0.0
        %664 = vmatpush.msra.mxu0 0.0
        %665 = vmatpush.msra.mxu0 0.0
        %666 = vmatpush.msra.mxu0 0.0
        %667 = vmatpush.msra.mxu0 0.0
        %668 = vmatpush.msra.mxu0 %v646
        %669 = vmatmul.f32.gmra.mxu0 %v651
        %v670 = vpop.f32.mrf.mxu0
        %v671 = vadd.f32 0.0, %v670
        %672 = vdwg.mxu0
        %v674 = vsel %vm405, %v598, 0
        %676 = vmatpush.msra.mxu0 0.0
        %677 = vmatpush.msra.mxu0 0.0
        %678 = vmatpush.msra.mxu0 0.0
        %679 = vmatpush.msra.mxu0 0.0
        %680 = vmatpush.msra.mxu0 0.0
        %681 = vmatpush.msra.mxu0 0.0
        %682 = vmatpush.msra.mxu0 0.0
        %683 = vmatpush.msra.mxu0 0.0
        %684 = vmatpush.msra.mxu0 0.0
        %685 = vmatpush.msra.mxu0 0.0
        %686 = vmatpush.msra.mxu0 0.0
        %687 = vmatpush.msra.mxu0 0.0
        %688 = vmatpush.msra.mxu0 0.0
        %689 = vmatpush.msra.mxu0 0.0
        %690 = vmatpush.msra.mxu0 0.0
        %691 = vmatpush.msra.mxu0 %v647
        %692 = vmatmul.f32.gmra.mxu0 %v674
        %v693 = vpop.f32.mrf.mxu0
        %v694 = vadd.f32 0.0, %v693
        %695 = vdwg.mxu0
        %v697 = vsel %vm405, %v621, 0
        %699 = vmatpush.msra.mxu0 0.0
        %700 = vmatpush.msra.mxu0 0.0
        %701 = vmatpush.msra.mxu0 0.0
        %702 = vmatpush.msra.mxu0 0.0
        %703 = vmatpush.msra.mxu0 0.0
        %704 = vmatpush.msra.mxu0 0.0
        %705 = vmatpush.msra.mxu0 0.0
        %706 = vmatpush.msra.mxu0 0.0
        %707 = vmatpush.msra.mxu0 0.0
        %708 = vmatpush.msra.mxu0 0.0
        %709 = vmatpush.msra.mxu0 0.0
        %710 = vmatpush.msra.mxu0 0.0
        %711 = vmatpush.msra.mxu0 0.0
        %712 = vmatpush.msra.mxu0 0.0
        %713 = vmatpush.msra.mxu0 0.0
        %714 = vmatpush.msra.mxu0 %v648
        %715 = vmatmul.f32.gmra.mxu0 %v697
        %v716 = vpop.f32.mrf.mxu0
        %v717 = vadd.f32 0.0, %v716
        %718 = vdwg.mxu0
        %v720 = vsel %vm405, %v644, 0
        %722 = vmatpush.msra.mxu0 0.0
        %723 = vmatpush.msra.mxu0 0.0
        %724 = vmatpush.msra.mxu0 0.0
        %725 = vmatpush.msra.mxu0 0.0
        %726 = vmatpush.msra.mxu0 0.0
        %727 = vmatpush.msra.mxu0 0.0
        %728 = vmatpush.msra.mxu0 0.0
        %729 = vmatpush.msra.mxu0 0.0
        %730 = vmatpush.msra.mxu0 0.0
        %731 = vmatpush.msra.mxu0 0.0
        %732 = vmatpush.msra.mxu0 0.0
        %733 = vmatpush.msra.mxu0 0.0
        %734 = vmatpush.msra.mxu0 0.0
        %735 = vmatpush.msra.mxu0 0.0
        %736 = vmatpush.msra.mxu0 0.0
        %737 = vmatpush.msra.mxu0 %v649
        %738 = vmatmul.f32.gmra.mxu0 %v720
        %v739 = vpop.f32.mrf.mxu0
        %v740 = vadd.f32 0.0, %v739
        %741 = vdwg.mxu0
        %vm742 = vcmask 261120
        %v743 = vsel %vm742, %v671, 0.0
        %v744 = vsel %vm742, %v694, 0.0
        %v745 = vadd.f32 %v743, %v744
        %v746 = vsel %vm742, %v717, 0.0
        %v747 = vadd.f32 %v745, %v746
        %v748 = vsel %vm742, %v740, 0.0
        %v749 = vadd.f32 %v747, %v748
        %v750 = vld [vmem:[%s4] sm:$0x1]
        %v752 = vperm.slane %v750, 0
        %v754 = vadd.f32 %v749, %v752
        %755 = vst.msk [vmem:[%s288] sm:$0xff] %vm742, %v754
        %s756 = sand.u32 %s155, 1
        %s757 = scalar_lea.sflag [#allocation7], %s756
        %s758 = sand.u32 %s155, 1
        %s759 = smul.addr %s758, 8
        %s760 = scalar_lea.vmem [#allocation11], %s759
        // Predicated region
        $region57: #{tpu_custom_call.1} parent=39 // pred_check
          %p761 = pneg %p165
        $region58: #{tpu_custom_call.1} parent=39 // pred_check_branch
          %763 = sbr.rel (%p761) target = $region60
        $region59: #{tpu_custom_call.1} parent=39 // pred_region
          %765 = vsyncadd %s757, 0
          %s766 = sadd.s32 %s28, %s27
          %s767 = smul.addr %s766, 8
          %s768 = scalar_lea.hbm %s5, %s767
          %s770 = sshll.u32 %s760, 4
          %s771 = int_to_ptr.vmem [resolvable:$true] %s770
          %s772 = sshll.u32 %s768, 4
          %s773 = int_to_ptr.hbm [resolvable:$true] %s772
          %775 = dma.vmem_to_hbm [thread:$0]  %s771, 128, %s773, %s757
        $region60: #{tpu_custom_call.1} parent=39 // pred_fallthru
          _
      $region40: #{tpu_custom_call.1} parent=5 // pred_fallthru
        _
      %p776 = scmp.le.s32.totalorder 2, %s18
      // Predicated region
      $region61: #{tpu_custom_call.1} parent=5 // pred_check
        %p777 = pneg %p776
      $region62: #{tpu_custom_call.1} parent=5 // pred_check_branch
        %779 = sbr.rel (%p777) target = $region64
      $region63: #{tpu_custom_call.1} parent=5 // pred_region
        %s780 = ssub.s32 %s18, 2
        // Predicated region
        $region65: #{tpu_custom_call.1} parent=63 // pred_check
          %p781 = pneg %p171
        $region66: #{tpu_custom_call.1} parent=63 // pred_check_branch
          %783 = sbr.rel (%p781) target = $region68
        $region67: #{tpu_custom_call.1} parent=63 // pred_region
          %s784 = sand.u32 %s156, 1
          %s785 = scalar_lea.sflag [#allocation7], %s784
          %s786 = sand.u32 %s156, 1
          %s787 = smul.addr %s786, 8
          %s788 = scalar_lea.vmem [#allocation11], %s787
          %790 = dma.done %s785, 128
        $region68: #{tpu_custom_call.1} parent=63 // pred_fallthru
          _
      $region64: #{tpu_custom_call.1} parent=5 // pred_fallthru
        _
    $region6: #{tpu_custom_call.1} parent=1 // loop_footer
      %s22 = sadd.s32 1, %s18
    $region7: #{tpu_custom_call.1} parent=1 // loop_footer_branch
      %17 = sbr.rel target = $region3
    $region8: #{tpu_custom_call.1} parent=1 // loop_exit
      _
    %791 = vsyncpa [#allocation6], 1
    %s792 = scalar_lea.sflag [#allocation6], 1
    %793 = vsyncpa %s792, 1
    %794 = vsyncpa [#allocation9], 1
    %795 = vsyncpa [#allocation7], 1
    %s796 = scalar_lea.sflag [#allocation7], 1
    %797 = vsyncpa %s796, 1

</llo_original>
